<compile_context>
chip_gen: v6e
topology: v6e:2x2x1
jax: 0.10.0
libtpu: 0.0.40
codegen_flags: <defaults>
</compile_context>

<pallas_src>
import math

import jax
import jax.numpy as jnp
from jax.experimental import pallas as pl
from jax.experimental.pallas import tpu as pltpu


def _round_up(x, m):
    return ((x + m - 1) // m) * m


# ---------------------------------------------------------------------------
# Kernel
# ---------------------------------------------------------------------------
def _make_kernel(n_rest):
    """Ref order: x1, x2, w1_left, w1_right, b1, (w, b) * n_rest, wo, bo, out."""

    def kernel(x1_ref, x2_ref, w1l_ref, w1r_ref, b1_ref, *rest):
        out_ref = rest[-1]

        # First fused hidden layer: x1 @ [W1^b1 | 0] + x2 @ [0 | W1^b2].
        h = (jnp.dot(x1_ref[...].astype(w1l_ref.dtype), w1l_ref[...],
                     preferred_element_type=jnp.float32)
             + jnp.dot(x2_ref[...].astype(w1r_ref.dtype), w1r_ref[...],
                       preferred_element_type=jnp.float32))
        h = jnp.maximum(h + b1_ref[...], 0.0)          # (1,2h) bias broadcasts

        # Remaining fused (block-diagonal) hidden layers.
        for li in range(n_rest):
            w_ref = rest[2 * li]
            b_ref = rest[2 * li + 1]
            h = jnp.dot(h.astype(w_ref.dtype), w_ref[...],
                        preferred_element_type=jnp.float32)
            h = jnp.maximum(h + b_ref[...], 0.0)

        wo_ref = rest[2 * n_rest]                      # [Wo ; Wo] stacked
        bo_ref = rest[2 * n_rest + 1]
        # [h1 | h2] @ [Wo ; Wo] == h1 @ Wo + h2 @ Wo  (folds the branch sum).
        y = jnp.dot(h.astype(wo_ref.dtype), wo_ref[...],
                    preferred_element_type=jnp.float32) + bo_ref[...]
        # TODO(synk): output last dim (<128) lowers to masked vst; pack output
        # lane-dense (e.g. 32 rows x 4 outputs per 128-lane row) only if
        # profiling shows writeback dominating wall-minus-compute.
        out_ref[...] = y.astype(out_ref.dtype)

    return kernel


# ---------------------------------------------------------------------------
# Parameter packing: two branches -> one fused network
# ---------------------------------------------------------------------------
def _block_diag(a, b):
    z_tr = jnp.zeros((a.shape[0], b.shape[1]), a.dtype)
    z_bl = jnp.zeros((b.shape[0], a.shape[1]), a.dtype)
    return jnp.concatenate(
        [jnp.concatenate([a, z_tr], axis=1),
         jnp.concatenate([z_bl, b], axis=1)], axis=0)


def pack_params(params, weight_dtype=jnp.bfloat16):
    """Returns (first_layer, rest_layers, output_layer) of fused parameters."""
    b1_layers = params["branch1"]
    b2_layers = params["branch2"]

    (w1a, bia), (w1b, bib) = b1_layers[0], b2_layers[0]
    # First layer split so the kernel consumes x1/x2 directly (no concat):
    #   [x1|x2] @ blockdiag(A,B) == x1 @ [A|0] + x2 @ [0|B]
    w1_left = jnp.concatenate(
        [w1a, jnp.zeros((w1a.shape[0], w1b.shape[1]), w1a.dtype)],
        axis=1).astype(weight_dtype)
    w1_right = jnp.concatenate(
        [jnp.zeros((w1b.shape[0], w1a.shape[1]), w1b.dtype), w1b],
        axis=1).astype(weight_dtype)
    b1 = jnp.concatenate([bia, bib], axis=1).astype(jnp.float32)   # (1, 2h)

    rest = []
    for (wa, ba), (wb, bb) in zip(b1_layers[1:], b2_layers[1:]):
        rest.append((_block_diag(wa, wb).astype(weight_dtype),
                     jnp.concatenate([ba, bb], axis=1).astype(jnp.float32)))

    wo, bo = params["output"]
    wo_stacked = jnp.concatenate([wo, wo], axis=0).astype(weight_dtype)
    return (w1_left, w1_right, b1), rest, (wo_stacked, bo.astype(jnp.float32))


# ---------------------------------------------------------------------------
# Forward wrapper
# ---------------------------------------------------------------------------
def _pick_bm(batch):
    # Large tiles amortize per-step overhead (measured 29%->85% of roofline
    # going 128->512-row tiles), but keep >=2 grid steps whenever possible so
    # the "parallel" batch axis shards across both TensorCores on v7x.
    bm = min(512, _round_up(batch, 8))
    if batch > 8:
        bm = min(bm, _round_up(pl.cdiv(batch, 2), 8))
    return bm


def two_branch_qnet_forward(x1, x2, params, *, weight_dtype=jnp.bfloat16):
    batch = x1.shape[0]
    in1 = x1.shape[1]
    in2 = x2.shape[1]
    out_size = params["output"][0].shape[1]
    n_rest = len(params["branch1"]) - 1

    bm = _pick_bm(batch)
    padded_batch = _round_up(batch, bm)
    if padded_batch != batch:
        pad = padded_batch - batch
        x1 = jnp.pad(x1, ((0, pad), (0, 0)))
        x2 = jnp.pad(x2, ((0, pad), (0, 0)))

    (w1l, w1r, b1), rest_layers, (wo, bo) = pack_params(params, weight_dtype)
    weight_like = [w1l, w1r, b1]
    for (w, b) in rest_layers:
        weight_like += [w, b]
    weight_like += [wo, bo]

    # --- VMEM budget: per-block pipelined footprint only -------------------
    #  * x1/x2 and out blocks are double-buffered by the pipeline,
    #  * weights/biases have a constant index_map + Buffered(1) -> one copy.
    in_bytes = 2 * bm * (in1 * x1.dtype.itemsize + in2 * x2.dtype.itemsize)
    out_bytes = 2 * bm * out_size * jnp.dtype(jnp.float32).itemsize
    wb_bytes = sum(int(a.size) * a.dtype.itemsize for a in weight_like)
    need = in_bytes + out_bytes + wb_bytes
    vmem_limit = None
    if need > (16 << 20):
        # Cap well below v7x's 64 MiB physical VMEM to leave headroom for
        # pipeline buffers / internal scratch.
        vmem_limit = min(need + (16 << 20), 48 << 20)
    # TODO(synk): if hidden sizes ever outgrow VMEM, switch to a K/N-tiled
    # grid (and fp8 weights on v7x) instead of raising the limit further.

    compiler_params = pltpu.CompilerParams(
        dimension_semantics=("parallel",),
        vmem_limit_bytes=vmem_limit,
    )

    grid = (padded_batch // bm,)
    out_shape = jax.ShapeDtypeStruct((padded_batch, out_size), jnp.float32)

    def _run(single_buffer_weights):
        def _resident(arr):
            # Constant index_map -> fetched once; ask for one pipeline buffer
            # so resident weights are not double-buffered.
            if single_buffer_weights:
                return pl.BlockSpec(arr.shape, lambda i: (0, 0),
                                    pipeline_mode=pl.Buffered(1))
            return pl.BlockSpec(arr.shape, lambda i: (0, 0))

        in_specs = [pl.BlockSpec((bm, in1), lambda i: (i, 0)),
                    pl.BlockSpec((bm, in2), lambda i: (i, 0))]
        in_specs += [_resident(arr) for arr in weight_like]

        return pl.pallas_call(
            _make_kernel(n_rest),
            out_shape=out_shape,
            grid=grid,
            in_specs=in_specs,
            out_specs=pl.BlockSpec((bm, out_size), lambda i: (i, 0)),
            compiler_params=compiler_params,
        )(x1, x2, *weight_like)

    try:
        out = _run(True)
    except Exception:
        # TODO(synk): drop this fallback once pl.Buffered(1) single-buffering
        # of constant-index inputs is supported on all deployed jax versions.
        out = _run(False)
    return out[:batch]


# ---------------------------------------------------------------------------
# Init (mirrors torch kaiming_uniform_(nonlinearity='relu') + default bias)
# ---------------------------------------------------------------------------
def kaiming_uniform_linear(key, fan_in, fan_out):
    """W shape (fan_in, fan_out) (pre-transposed for x @ W); b shape (1, fan_out)."""
    kw, kb = jax.random.split(key)
    w_bound = math.sqrt(6.0 / fan_in)       # gain=sqrt(2), bound=gain*sqrt(3/fan_in)
    w = jax.random.uniform(kw, (fan_in, fan_out), jnp.float32, -w_bound, w_bound)
    b_bound = 1.0 / math.sqrt(fan_in)       # torch Linear default bias init
    b = jax.random.uniform(kb, (1, fan_out), jnp.float32, -b_bound, b_bound)
    return w, b


def init_params(key, input_size_group1, input_size_group2, hidden_sizes, output_size):
    keys = jax.random.split(key, 2 * len(hidden_sizes) + 1)
    ki = 0

    def build_branch(input_size):
        nonlocal ki
        layers = []
        in_dim = input_size
        for h in hidden_sizes:
            layers.append(kaiming_uniform_linear(keys[ki], in_dim, h))
            ki += 1
            in_dim = h
        return layers

    branch1 = build_branch(input_size_group1)
    branch2 = build_branch(input_size_group2)
    output = kaiming_uniform_linear(keys[ki], hidden_sizes[-1], output_size)
    return {"branch1": branch1, "branch2": branch2, "output": output}


# ---------------------------------------------------------------------------
# References
# ---------------------------------------------------------------------------
def reference_forward_matched(x1, x2, params, weight_dtype=jnp.bfloat16):
    """Unfused reference using the same bf16 weight numerics as the kernel."""

    def dense(h, w, b):
        return jnp.dot(h.astype(weight_dtype), w.astype(weight_dtype),
                       preferred_element_type=jnp.float32) + b

    def branch(x, layers):
        h = x
        for (w, b) in layers:
            h = jnp.maximum(dense(h, w, b), 0.0)
        return h

    h1 = branch(x1, params["branch1"])
    h2 = branch(x2, params["branch2"])
    wo, bo = params["output"]
    return (jnp.dot(h1.astype(weight_dtype), wo.astype(weight_dtype),
                    preferred_element_type=jnp.float32)
            + jnp.dot(h2.astype(weight_dtype), wo.astype(weight_dtype),
                      preferred_element_type=jnp.float32) + bo)


def reference_forward_f32(x1, x2, params):
    """Full-f32 (HIGHEST precision) reference matching the PyTorch module."""
    hp = jax.lax.Precision.HIGHEST

    def branch(x, layers):
        h = x
        for (w, b) in layers:
            h = jnp.maximum(jnp.dot(h, w, precision=hp) + b, 0.0)
        return h

    h = branch(x1, params["branch1"]) + branch(x2, params["branch2"])
    wo, bo = params["output"]
    return jnp.dot(h, wo, precision=hp) + bo


# ---------------------------------------------------------------------------
if __name__ == "__main__":
    input_size_group1 = 16
    input_size_group2 = 12
    hidden_sizes = [32, 32]
    output_size = 4

    key = jax.random.PRNGKey(0)
    kp, k1, k2, k3, k4 = jax.random.split(key, 5)
    params = init_params(kp, input_size_group1, input_size_group2,
                         hidden_sizes, output_size)

    # --- small batch (single grid step) ---
    batch = 8
    x1 = jax.random.normal(k1, (batch, input_size_group1), jnp.float32)
    x2 = jax.random.normal(k2, (batch, input_size_group2), jnp.float32)

    out = jax.block_until_ready(two_branch_qnet_forward(x1, x2, params))
    assert out.shape == (batch, output_size)
    ref_m = reference_forward_matched(x1, x2, params)
    ref_f = reference_forward_f32(x1, x2, params)
    assert jnp.allclose(out, ref_m, atol=1e-3, rtol=1e-3), "mismatch vs bf16 reference"
    assert jnp.allclose(out, ref_f, atol=5e-2, rtol=5e-2), "mismatch vs f32 reference"

    # --- larger batch: padding + multi-block parallel grid ---
    big = 200
    y1 = jax.random.normal(k3, (big, input_size_group1), jnp.float32)
    y2 = jax.random.normal(k4, (big, input_size_group2), jnp.float32)
    out_big = jax.block_until_ready(two_branch_qnet_forward(y1, y2, params))
    assert out_big.shape == (big, output_size)
    ref_big = reference_forward_matched(y1, y2, params)
    assert jnp.allclose(out_big, ref_big, atol=1e-3, rtol=1e-3), "mismatch (big batch)"

    # --- bf16 activations end-to-end (no wrapper-side cast added) ---
    y1_bf = y1.astype(jnp.bfloat16)
    y2_bf = y2.astype(jnp.bfloat16)
    out_bf = jax.block_until_ready(two_branch_qnet_forward(y1_bf, y2_bf, params))
    ref_bf = reference_forward_matched(y1_bf, y2_bf, params)
    assert jnp.allclose(out_bf, ref_bf, atol=1e-3, rtol=1e-3), "mismatch (bf16 inputs)"

    print("KERNEL_OK")
</pallas_src>

<mosaic_0001>
module attributes {stable_mosaic.version = 11 : i64} {
  func.func @kernel(%arg0: i32, %arg1: memref<8x16xf32, #tpu.memory_space<vmem>>, %arg2: memref<8x12xf32, #tpu.memory_space<vmem>>, %arg3: memref<16x64xbf16, #tpu.memory_space<vmem>>, %arg4: memref<12x64xbf16, #tpu.memory_space<vmem>>, %arg5: memref<1x64xf32, #tpu.memory_space<vmem>>, %arg6: memref<64x64xbf16, #tpu.memory_space<vmem>>, %arg7: memref<1x64xf32, #tpu.memory_space<vmem>>, %arg8: memref<64x4xbf16, #tpu.memory_space<vmem>>, %arg9: memref<1x4xf32, #tpu.memory_space<vmem>>, %arg10: memref<8x4xf32, #tpu.memory_space<vmem>>) attributes {dimension_semantics = [#tpu.dimension_semantics<parallel>], iteration_bounds = array<i64: 1>, scalar_prefetch = 0 : i64, scratch_operands = 0 : i64, tpu.core_type = #tpu.core_type<tc>, window_params = [{transform_indices = @transform_0, window_bounds = array<i64: 8, 16>}, {transform_indices = @transform_1, window_bounds = array<i64: 8, 12>}, {pipeline_mode = #tpu.pipeline_mode<synchronous>, transform_indices = @transform_2, window_bounds = array<i64: 16, 64>}, {pipeline_mode = #tpu.pipeline_mode<synchronous>, transform_indices = @transform_3, window_bounds = array<i64: 12, 64>}, {pipeline_mode = #tpu.pipeline_mode<synchronous>, transform_indices = @transform_4, window_bounds = array<i64: 1, 64>}, {pipeline_mode = #tpu.pipeline_mode<synchronous>, transform_indices = @transform_5, window_bounds = array<i64: 64, 64>}, {pipeline_mode = #tpu.pipeline_mode<synchronous>, transform_indices = @transform_6, window_bounds = array<i64: 1, 64>}, {pipeline_mode = #tpu.pipeline_mode<synchronous>, transform_indices = @transform_7, window_bounds = array<i64: 64, 4>}, {pipeline_mode = #tpu.pipeline_mode<synchronous>, transform_indices = @transform_8, window_bounds = array<i64: 1, 4>}, {transform_indices = @transform_9, window_bounds = array<i64: 8, 4>}]} {
    %c0 = arith.constant 0 : index
    %c0_0 = arith.constant 0 : index
    %0 = vector.load %arg1[%c0, %c0_0] : memref<8x16xf32, #tpu.memory_space<vmem>>, vector<8x16xf32>
    %1 = arith.truncf %0 : vector<8x16xf32> to vector<8x16xbf16>
    %c0_1 = arith.constant 0 : index
    %c0_2 = arith.constant 0 : index
    %2 = vector.load %arg3[%c0_1, %c0_2] : memref<16x64xbf16, #tpu.memory_space<vmem>>, vector<16x64xbf16>
    %cst = arith.constant dense<0.000000e+00> : vector<8x64xf32>
    %3 = tpu.matmul %1, %2, %cst {dimension_numbers = #tpu.dot_dimension_numbers<[1], [0], [0], [1], [0, 0, 1, 1], [], []>} : vector<8x16xbf16>, vector<16x64xbf16>, vector<8x64xf32> -> vector<8x64xf32>
    %c0_3 = arith.constant 0 : index
    %c0_4 = arith.constant 0 : index
    %4 = vector.load %arg2[%c0_3, %c0_4] : memref<8x12xf32, #tpu.memory_space<vmem>>, vector<8x12xf32>
    %5 = arith.truncf %4 : vector<8x12xf32> to vector<8x12xbf16>
    %c0_5 = arith.constant 0 : index
    %c0_6 = arith.constant 0 : index
    %6 = vector.load %arg4[%c0_5, %c0_6] : memref<12x64xbf16, #tpu.memory_space<vmem>>, vector<12x64xbf16>
    %cst_7 = arith.constant dense<0.000000e+00> : vector<8x64xf32>
    %7 = tpu.matmul %5, %6, %cst_7 {dimension_numbers = #tpu.dot_dimension_numbers<[1], [0], [0], [1], [0, 0, 1, 1], [], []>} : vector<8x12xbf16>, vector<12x64xbf16>, vector<8x64xf32> -> vector<8x64xf32>
    %8 = arith.addf %3, %7 : vector<8x64xf32>
    %c0_8 = arith.constant 0 : index
    %c0_9 = arith.constant 0 : index
    %9 = vector.load %arg5[%c0_8, %c0_9] : memref<1x64xf32, #tpu.memory_space<vmem>>, vector<1x64xf32>
    %10 = vector.broadcast %9 : vector<1x64xf32> to vector<8x64xf32>
    %11 = arith.addf %8, %10 : vector<8x64xf32>
    %cst_10 = arith.constant 0.000000e+00 : f32
    %12 = vector.broadcast %cst_10 : f32 to vector<8x64xf32>
    %13 = arith.maximumf %11, %12 : vector<8x64xf32>
    %14 = arith.truncf %13 : vector<8x64xf32> to vector<8x64xbf16>
    %c0_11 = arith.constant 0 : index
    %c0_12 = arith.constant 0 : index
    %15 = vector.load %arg6[%c0_11, %c0_12] : memref<64x64xbf16, #tpu.memory_space<vmem>>, vector<64x64xbf16>
    %cst_13 = arith.constant dense<0.000000e+00> : vector<8x64xf32>
    %16 = tpu.matmul %14, %15, %cst_13 {dimension_numbers = #tpu.dot_dimension_numbers<[1], [0], [0], [1], [0, 0, 1, 1], [], []>} : vector<8x64xbf16>, vector<64x64xbf16>, vector<8x64xf32> -> vector<8x64xf32>
    %c0_14 = arith.constant 0 : index
    %c0_15 = arith.constant 0 : index
    %17 = vector.load %arg7[%c0_14, %c0_15] : memref<1x64xf32, #tpu.memory_space<vmem>>, vector<1x64xf32>
    %18 = vector.broadcast %17 : vector<1x64xf32> to vector<8x64xf32>
    %19 = arith.addf %16, %18 : vector<8x64xf32>
    %cst_16 = arith.constant 0.000000e+00 : f32
    %20 = vector.broadcast %cst_16 : f32 to vector<8x64xf32>
    %21 = arith.maximumf %19, %20 : vector<8x64xf32>
    %22 = arith.truncf %21 : vector<8x64xf32> to vector<8x64xbf16>
    %c0_17 = arith.constant 0 : index
    %c0_18 = arith.constant 0 : index
    %23 = vector.load %arg8[%c0_17, %c0_18] : memref<64x4xbf16, #tpu.memory_space<vmem>>, vector<64x4xbf16>
    %cst_19 = arith.constant dense<0.000000e+00> : vector<8x4xf32>
    %24 = tpu.matmul %22, %23, %cst_19 {dimension_numbers = #tpu.dot_dimension_numbers<[1], [0], [0], [1], [0, 0, 1, 1], [], []>} : vector<8x64xbf16>, vector<64x4xbf16>, vector<8x4xf32> -> vector<8x4xf32>
    %c0_20 = arith.constant 0 : index
    %c0_21 = arith.constant 0 : index
    %25 = vector.load %arg9[%c0_20, %c0_21] : memref<1x4xf32, #tpu.memory_space<vmem>>, vector<1x4xf32>
    %26 = vector.broadcast %25 : vector<1x4xf32> to vector<8x4xf32>
    %27 = arith.addf %24, %26 : vector<8x4xf32>
    %c0_22 = arith.constant 0 : index
    %c0_23 = arith.constant 0 : index
    %28 = vector.load %arg10[%c0_22, %c0_23] : memref<8x4xf32, #tpu.memory_space<vmem>>, vector<8x4xf32>
    tpu.vector_store %arg10[%c0_22, %c0_23], %27 {strides = array<i32>} : memref<8x4xf32, #tpu.memory_space<vmem>>, vector<8x4xf32>,
    return
  }
  func.func @transform_0(%arg0: i32) -> (i32, i32) {
    %c0_i32 = arith.constant 0 : i32
    %c0_i32_0 = arith.constant 0 : i32
    return %arg0, %c0_i32 : i32, i32
  }
  func.func @transform_1(%arg0: i32) -> (i32, i32) {
    %c0_i32 = arith.constant 0 : i32
    %c0_i32_0 = arith.constant 0 : i32
    return %arg0, %c0_i32 : i32, i32
  }
  func.func @transform_2(%arg0: i32) -> (i32, i32) {
    %c0_i32 = arith.constant 0 : i32
    %c0_i32_0 = arith.constant 0 : i32
    %c0_i32_1 = arith.constant 0 : i32
    return %c0_i32, %c0_i32_0 : i32, i32
  }
  func.func @transform_3(%arg0: i32) -> (i32, i32) {
    %c0_i32 = arith.constant 0 : i32
    %c0_i32_0 = arith.constant 0 : i32
    %c0_i32_1 = arith.constant 0 : i32
    return %c0_i32, %c0_i32_0 : i32, i32
  }
  func.func @transform_4(%arg0: i32) -> (i32, i32) {
    %c0_i32 = arith.constant 0 : i32
    %c0_i32_0 = arith.constant 0 : i32
    %c0_i32_1 = arith.constant 0 : i32
    return %c0_i32, %c0_i32_0 : i32, i32
  }
  func.func @transform_5(%arg0: i32) -> (i32, i32) {
    %c0_i32 = arith.constant 0 : i32
    %c0_i32_0 = arith.constant 0 : i32
    %c0_i32_1 = arith.constant 0 : i32
    return %c0_i32, %c0_i32_0 : i32, i32
  }
  func.func @transform_6(%arg0: i32) -> (i32, i32) {
    %c0_i32 = arith.constant 0 : i32
    %c0_i32_0 = arith.constant 0 : i32
    %c0_i32_1 = arith.constant 0 : i32
    return %c0_i32, %c0_i32_0 : i32, i32
  }
  func.func @transform_7(%arg0: i32) -> (i32, i32) {
    %c0_i32 = arith.constant 0 : i32
    %c0_i32_0 = arith.constant 0 : i32
    %c0_i32_1 = arith.constant 0 : i32
    return %c0_i32, %c0_i32_0 : i32, i32
  }
  func.func @transform_8(%arg0: i32) -> (i32, i32) {
    %c0_i32 = arith.constant 0 : i32
    %c0_i32_0 = arith.constant 0 : i32
    %c0_i32_1 = arith.constant 0 : i32
    return %c0_i32, %c0_i32_0 : i32, i32
  }
  func.func @transform_9(%arg0: i32) -> (i32, i32) {
    %c0_i32 = arith.constant 0 : i32
    %c0_i32_0 = arith.constant 0 : i32
    return %arg0, %c0_i32 : i32, i32
  }
}

module attributes {stable_mosaic.version = 11 : i64} {
  func.func @kernel(%arg0: i32, %arg1: memref<8x16xf32, #tpu.memory_space<vmem>>, %arg2: memref<8x12xf32, #tpu.memory_space<vmem>>, %arg3: memref<16x64xbf16, #tpu.memory_space<vmem>>, %arg4: memref<12x64xbf16, #tpu.memory_space<vmem>>, %arg5: memref<1x64xf32, #tpu.memory_space<vmem>>, %arg6: memref<64x64xbf16, #tpu.memory_space<vmem>>, %arg7: memref<1x64xf32, #tpu.memory_space<vmem>>, %arg8: memref<64x4xbf16, #tpu.memory_space<vmem>>, %arg9: memref<1x4xf32, #tpu.memory_space<vmem>>, %arg10: memref<8x4xf32, #tpu.memory_space<vmem>>) attributes {dimension_semantics = [#tpu.dimension_semantics<parallel>], iteration_bounds = array<i64: 1>, scalar_prefetch = 0 : i64, scratch_operands = 0 : i64, tpu.core_type = #tpu.core_type<tc>, window_params = [{transform_indices = @transform_0, window_bounds = array<i64: 8, 16>}, {transform_indices = @transform_1, window_bounds = array<i64: 8, 12>}, {pipeline_mode = #tpu.pipeline_mode<synchronous>, transform_indices = @transform_2, window_bounds = array<i64: 16, 64>}, {pipeline_mode = #tpu.pipeline_mode<synchronous>, transform_indices = @transform_3, window_bounds = array<i64: 12, 64>}, {pipeline_mode = #tpu.pipeline_mode<synchronous>, transform_indices = @transform_4, window_bounds = array<i64: 1, 64>}, {pipeline_mode = #tpu.pipeline_mode<synchronous>, transform_indices = @transform_5, window_bounds = array<i64: 64, 64>}, {pipeline_mode = #tpu.pipeline_mode<synchronous>, transform_indices = @transform_6, window_bounds = array<i64: 1, 64>}, {pipeline_mode = #tpu.pipeline_mode<synchronous>, transform_indices = @transform_7, window_bounds = array<i64: 64, 4>}, {pipeline_mode = #tpu.pipeline_mode<synchronous>, transform_indices = @transform_8, window_bounds = array<i64: 1, 4>}, {transform_indices = @transform_9, window_bounds = array<i64: 8, 4>}]} {
    %c0 = arith.constant 0 : index
    %c0_0 = arith.constant 0 : index
    %0 = vector.load %arg1[%c0, %c0_0] : memref<8x16xf32, #tpu.memory_space<vmem>>, vector<8x16xf32>
    %1 = arith.truncf %0 : vector<8x16xf32> to vector<8x16xbf16>
    %c0_1 = arith.constant 0 : index
    %c0_2 = arith.constant 0 : index
    %2 = vector.load %arg3[%c0_1, %c0_2] : memref<16x64xbf16, #tpu.memory_space<vmem>>, vector<16x64xbf16>
    %cst = arith.constant dense<0.000000e+00> : vector<8x64xf32>
    %3 = tpu.matmul %1, %2, %cst {dimension_numbers = #tpu.dot_dimension_numbers<[1], [0], [0], [1], [0, 0, 1, 1], [], []>} : vector<8x16xbf16>, vector<16x64xbf16>, vector<8x64xf32> -> vector<8x64xf32>
    %c0_3 = arith.constant 0 : index
    %c0_4 = arith.constant 0 : index
    %4 = vector.load %arg2[%c0_3, %c0_4] : memref<8x12xf32, #tpu.memory_space<vmem>>, vector<8x12xf32>
    %5 = arith.truncf %4 : vector<8x12xf32> to vector<8x12xbf16>
    %c0_5 = arith.constant 0 : index
    %c0_6 = arith.constant 0 : index
    %6 = vector.load %arg4[%c0_5, %c0_6] : memref<12x64xbf16, #tpu.memory_space<vmem>>, vector<12x64xbf16>
    %cst_7 = arith.constant dense<0.000000e+00> : vector<8x64xf32>
    %7 = tpu.matmul %5, %6, %cst_7 {dimension_numbers = #tpu.dot_dimension_numbers<[1], [0], [0], [1], [0, 0, 1, 1], [], []>} : vector<8x12xbf16>, vector<12x64xbf16>, vector<8x64xf32> -> vector<8x64xf32>
    %8 = arith.addf %3, %7 : vector<8x64xf32>
    %c0_8 = arith.constant 0 : index
    %c0_9 = arith.constant 0 : index
    %9 = vector.load %arg5[%c0_8, %c0_9] : memref<1x64xf32, #tpu.memory_space<vmem>>, vector<1x64xf32>
    %10 = vector.broadcast %9 : vector<1x64xf32> to vector<8x64xf32>
    %11 = arith.addf %8, %10 : vector<8x64xf32>
    %cst_10 = arith.constant 0.000000e+00 : f32
    %12 = vector.broadcast %cst_10 : f32 to vector<8x64xf32>
    %13 = arith.maximumf %11, %12 : vector<8x64xf32>
    %14 = arith.truncf %13 : vector<8x64xf32> to vector<8x64xbf16>
    %c0_11 = arith.constant 0 : index
    %c0_12 = arith.constant 0 : index
    %15 = vector.load %arg6[%c0_11, %c0_12] : memref<64x64xbf16, #tpu.memory_space<vmem>>, vector<64x64xbf16>
    %cst_13 = arith.constant dense<0.000000e+00> : vector<8x64xf32>
    %16 = tpu.matmul %14, %15, %cst_13 {dimension_numbers = #tpu.dot_dimension_numbers<[1], [0], [0], [1], [0, 0, 1, 1], [], []>} : vector<8x64xbf16>, vector<64x64xbf16>, vector<8x64xf32> -> vector<8x64xf32>
    %c0_14 = arith.constant 0 : index
    %c0_15 = arith.constant 0 : index
    %17 = vector.load %arg7[%c0_14, %c0_15] : memref<1x64xf32, #tpu.memory_space<vmem>>, vector<1x64xf32>
    %18 = vector.broadcast %17 : vector<1x64xf32> to vector<8x64xf32>
    %19 = arith.addf %16, %18 : vector<8x64xf32>
    %cst_16 = arith.constant 0.000000e+00 : f32
    %20 = vector.broadcast %cst_16 : f32 to vector<8x64xf32>
    %21 = arith.maximumf %19, %20 : vector<8x64xf32>
    %22 = arith.truncf %21 : vector<8x64xf32> to vector<8x64xbf16>
    %c0_17 = arith.constant 0 : index
    %c0_18 = arith.constant 0 : index
    %23 = vector.load %arg8[%c0_17, %c0_18] : memref<64x4xbf16, #tpu.memory_space<vmem>>, vector<64x4xbf16>
    %cst_19 = arith.constant dense<0.000000e+00> : vector<8x4xf32>
    %24 = tpu.matmul %22, %23, %cst_19 {dimension_numbers = #tpu.dot_dimension_numbers<[1], [0], [0], [1], [0, 0, 1, 1], [], []>} : vector<8x64xbf16>, vector<64x4xbf16>, vector<8x4xf32> -> vector<8x4xf32>
    %c0_20 = arith.constant 0 : index
    %c0_21 = arith.constant 0 : index
    %25 = vector.load %arg9[%c0_20, %c0_21] : memref<1x4xf32, #tpu.memory_space<vmem>>, vector<1x4xf32>
    %26 = vector.broadcast %25 : vector<1x4xf32> to vector<8x4xf32>
    %27 = arith.addf %24, %26 : vector<8x4xf32>
    %c0_22 = arith.constant 0 : index
    %c0_23 = arith.constant 0 : index
    %28 = vector.load %arg10[%c0_22, %c0_23] : memref<8x4xf32, #tpu.memory_space<vmem>>, vector<8x4xf32>
    tpu.vector_store %arg10[%c0_22, %c0_23], %27 {strides = array<i32>} : memref<8x4xf32, #tpu.memory_space<vmem>>, vector<8x4xf32>,
    return
  }
  func.func @transform_0(%arg0: i32) -> (i32, i32) {
    %c0_i32 = arith.constant 0 : i32
    %c0_i32_0 = arith.constant 0 : i32
    return %arg0, %c0_i32 : i32, i32
  }
  func.func @transform_1(%arg0: i32) -> (i32, i32) {
    %c0_i32 = arith.constant 0 : i32
    %c0_i32_0 = arith.constant 0 : i32
    return %arg0, %c0_i32 : i32, i32
  }
  func.func @transform_2(%arg0: i32) -> (i32, i32) {
    %c0_i32 = arith.constant 0 : i32
    %c0_i32_0 = arith.constant 0 : i32
    %c0_i32_1 = arith.constant 0 : i32
    return %c0_i32, %c0_i32_0 : i32, i32
  }
  func.func @transform_3(%arg0: i32) -> (i32, i32) {
    %c0_i32 = arith.constant 0 : i32
    %c0_i32_0 = arith.constant 0 : i32
    %c0_i32_1 = arith.constant 0 : i32
    return %c0_i32, %c0_i32_0 : i32, i32
  }
  func.func @transform_4(%arg0: i32) -> (i32, i32) {
    %c0_i32 = arith.constant 0 : i32
    %c0_i32_0 = arith.constant 0 : i32
    %c0_i32_1 = arith.constant 0 : i32
    return %c0_i32, %c0_i32_0 : i32, i32
  }
  func.func @transform_5(%arg0: i32) -> (i32, i32) {
    %c0_i32 = arith.constant 0 : i32
    %c0_i32_0 = arith.constant 0 : i32
    %c0_i32_1 = arith.constant 0 : i32
    return %c0_i32, %c0_i32_0 : i32, i32
  }
  func.func @transform_6(%arg0: i32) -> (i32, i32) {
    %c0_i32 = arith.constant 0 : i32
    %c0_i32_0 = arith.constant 0 : i32
    %c0_i32_1 = arith.constant 0 : i32
    return %c0_i32, %c0_i32_0 : i32, i32
  }
  func.func @transform_7(%arg0: i32) -> (i32, i32) {
    %c0_i32 = arith.constant 0 : i32
    %c0_i32_0 = arith.constant 0 : i32
    %c0_i32_1 = arith.constant 0 : i32
    return %c0_i32, %c0_i32_0 : i32, i32
  }
  func.func @transform_8(%arg0: i32) -> (i32, i32) {
    %c0_i32 = arith.constant 0 : i32
    %c0_i32_0 = arith.constant 0 : i32
    %c0_i32_1 = arith.constant 0 : i32
    return %c0_i32, %c0_i32_0 : i32, i32
  }
  func.func @transform_9(%arg0: i32) -> (i32, i32) {
    %c0_i32 = arith.constant 0 : i32
    %c0_i32_0 = arith.constant 0 : i32
    return %arg0, %c0_i32 : i32, i32
  }
}

</mosaic_0001>

<llo_original>
// kernel: tpu_custom_call.1
$region0: #{tpu_custom_call.1}
  #allocation0 [shape = 'u32[]', space=smem, size = 0x4, offset = 0x4, fixed_abs, tag = 'smem constant byte address 0x4 - core index']
  #allocation1 [shape = 'u32[144,128]{1,0:T(1,128)}', space=vmem, size = 0x12000, scoped, tag = 'internal scratch']
  %s0 = inlined_call_operand.vmem [shape: f32[8,16], index: 0, kind: input, shape index: {}]
  %s1 = inlined_call_operand.hbm [shape: f32[8,12], index: 1, kind: input, shape index: {}]
  %s2 = inlined_call_operand.hbm [shape: bf16[16,64], index: 2, kind: input, shape index: {}]
  %s3 = inlined_call_operand.hbm [shape: bf16[12,64], index: 3, kind: input, shape index: {}]
  %s4 = inlined_call_operand.vmem [shape: f32[1,64], index: 4, kind: input, shape index: {}]
  %s5 = inlined_call_operand.vmem [shape: bf16[64,64], index: 5, kind: input, shape index: {}]
  %s6 = inlined_call_operand.vmem [shape: f32[1,64], index: 6, kind: input, shape index: {}]
  %s7 = inlined_call_operand.vmem [shape: bf16[64,4], index: 7, kind: input, shape index: {}]
  %s8 = inlined_call_operand.vmem [shape: f32[1,4], index: 8, kind: input, shape index: {}]
  %s9 = inlined_call_operand.vmem [shape: f32[8,4], index: 9, kind: output, shape index: {}]
  %s10 = sld [smem:[#allocation0]]
  $region58: #{tpu_custom_call.1} parent=0
    _
  %s12 = ssub.s32 1, %s10
  %s13 = scalar_select 0, %s12, %s10
  $region1: #{tpu_custom_call.1} parent=0
    #allocation2 [shape = 'u8[4096]{0}', space=vmem, size = 0x1000, scoped, tag = 'input window, operand 1, single buffered']
    #allocation3 [shape = 's32[1]{0}', space=sflag, size = 0x4, scoped, tag = 'scoped memory for tpu_custom_call.1']
    #allocation4 [shape = 'u8[4096]{0}', space=vmem, size = 0x1000, scoped, tag = 'input window, operand 2, single buffered']
    #allocation5 [shape = 's32[1]{0}', space=sflag, size = 0x4, scoped, tag = 'scoped memory for tpu_custom_call.1']
    #allocation6 [shape = 'u8[4096]{0}', space=vmem, size = 0x1000, scoped, tag = 'input window, operand 3, single buffered']
    %14 = vsyncpa [#allocation3], 0
    %15 = vsyncpa [#allocation5], 0
    // Predicated region
    $region2: #{tpu_custom_call.1} parent=1 // pred_check
      _
    $region3: #{tpu_custom_call.1} parent=1 // pred_check_branch
      %17 = sbr.rel (0) target = $region5
    $region4: #{tpu_custom_call.1} parent=1 // pred_region
      _
    $region5: #{tpu_custom_call.1} parent=1 // pred_fallthru
      _
    // Predicated region
    $region6: #{tpu_custom_call.1} parent=1 // pred_check
      _
    $region7: #{tpu_custom_call.1} parent=1 // pred_check_branch
      %19 = sbr.rel (0) target = $region9
    $region8: #{tpu_custom_call.1} parent=1 // pred_region
      %s21 = ssub.s32 128, 128
      %22 = vsyncadd [#allocation3], %s21
      %s24 = sshll.u32 [#allocation2], 4
      %s25 = int_to_ptr.vmem [resolvable:$true] %s24
      %27 = dma.hbm_to_vmem [thread:$0]  %s1, 128, %s25, [#allocation3]
    $region9: #{tpu_custom_call.1} parent=1 // pred_fallthru
      _
    // Predicated region
    $region10: #{tpu_custom_call.1} parent=1 // pred_check
      _
    $region11: #{tpu_custom_call.1} parent=1 // pred_check_branch
      %29 = sbr.rel (0) target = $region13
    $region12: #{tpu_custom_call.1} parent=1 // pred_region
      %s31 = ssub.s32 128, 128
      %32 = vsyncadd [#allocation5], %s31
      %s33 = sshll.u32 [#allocation4], 4
      %s34 = int_to_ptr.vmem [resolvable:$true] %s33
      %39 = dma.hbm_to_vmem [thread:$0]  %s2, 128, %s34, [#allocation5], 64, 64, 4
    $region13: #{tpu_custom_call.1} parent=1 // pred_fallthru
      _
    // Predicated region
    $region14: #{tpu_custom_call.1} parent=1 // pred_check
      _
    $region15: #{tpu_custom_call.1} parent=1 // pred_check_branch
      %41 = sbr.rel (0) target = $region17
    $region16: #{tpu_custom_call.1} parent=1 // pred_region
      %s43 = ssub.s32 128, 128
      %44 = vsyncadd [#allocation5], %s43
      %s45 = sshll.u32 [#allocation6], 4
      %s46 = int_to_ptr.vmem [resolvable:$true] %s45
      %51 = dma.hbm_to_vmem [thread:$0]  %s3, 128, %s46, [#allocation5], 64, 64, 4
    $region17: #{tpu_custom_call.1} parent=1 // pred_fallthru
      _
    // Predicated region
    $region18: #{tpu_custom_call.1} parent=1 // pred_check
      _
    $region19: #{tpu_custom_call.1} parent=1 // pred_check_branch
      %53 = sbr.rel (0) target = $region21
    $region20: #{tpu_custom_call.1} parent=1 // pred_region
      _
    $region21: #{tpu_custom_call.1} parent=1 // pred_fallthru
      _
    // Predicated region
    $region22: #{tpu_custom_call.1} parent=1 // pred_check
      _
    $region23: #{tpu_custom_call.1} parent=1 // pred_check_branch
      %55 = sbr.rel (0) target = $region25
    $region24: #{tpu_custom_call.1} parent=1 // pred_region
      _
    $region25: #{tpu_custom_call.1} parent=1 // pred_fallthru
      _
    // Predicated region
    $region26: #{tpu_custom_call.1} parent=1 // pred_check
      _
    $region27: #{tpu_custom_call.1} parent=1 // pred_check_branch
      %57 = sbr.rel (0) target = $region29
    $region28: #{tpu_custom_call.1} parent=1 // pred_region
      _
    $region29: #{tpu_custom_call.1} parent=1 // pred_fallthru
      _
    // Predicated region
    $region30: #{tpu_custom_call.1} parent=1 // pred_check
      _
    $region31: #{tpu_custom_call.1} parent=1 // pred_check_branch
      %59 = sbr.rel (0) target = $region33
    $region32: #{tpu_custom_call.1} parent=1 // pred_region
      _
    $region33: #{tpu_custom_call.1} parent=1 // pred_fallthru
      _
    // Predicated region
    $region34: #{tpu_custom_call.1} parent=1 // pred_check
      _
    $region35: #{tpu_custom_call.1} parent=1 // pred_check_branch
      %61 = sbr.rel (0) target = $region37
    $region36: #{tpu_custom_call.1} parent=1 // pred_region
      _
    $region37: #{tpu_custom_call.1} parent=1 // pred_fallthru
      _
    // Predicated region
    $region38: #{tpu_custom_call.1} parent=1 // pred_check
      _
    $region39: #{tpu_custom_call.1} parent=1 // pred_check_branch
      %63 = sbr.rel (0) target = $region41
    $region40: #{tpu_custom_call.1} parent=1 // pred_region
      %64 = dma.done [#allocation3], 128
    $region41: #{tpu_custom_call.1} parent=1 // pred_fallthru
      _
    // Predicated region
    $region42: #{tpu_custom_call.1} parent=1 // pred_check
      _
    $region43: #{tpu_custom_call.1} parent=1 // pred_check_branch
      %66 = sbr.rel (0) target = $region45
    $region44: #{tpu_custom_call.1} parent=1 // pred_region
      %67 = dma.done [#allocation5], 128
    $region45: #{tpu_custom_call.1} parent=1 // pred_fallthru
      _
    // Predicated region
    $region46: #{tpu_custom_call.1} parent=1 // pred_check
      _
    $region47: #{tpu_custom_call.1} parent=1 // pred_check_branch
      %69 = sbr.rel (0) target = $region49
    $region48: #{tpu_custom_call.1} parent=1 // pred_region
      %70 = dma.done [#allocation5], 128
    $region49: #{tpu_custom_call.1} parent=1 // pred_fallthru
      _
    %v72 = vld [vmem:[%s0] sm:$0xff]
    %v73 = vpack.c.bf16 %v72, %v72
    %v74 = vld [vmem:[#allocation4] sm:$0xf]
    %v75 = vld [vmem:[#allocation4 + $0x4] sm:$0xf]
    %v76 = vld [vmem:[#allocation2] sm:$0xff]
    %v77 = vpack.c.bf16 %v76, %v76
    %v78 = vld [vmem:[#allocation6] sm:$0xf]
    %v79 = vld [vmem:[#allocation6 + $0x4] sm:$0x3]
    %v82 = vunpack.c.l.b16 %v78
    %v83 = vunpack.c.l.b16 %v79
    %v84 = vpack.c.b16 %v83, %v82
    %vm85 = vcmask 97280
    %v87 = vsel %vm85, %v77, 0
    %vm89 = vcmask 1045504
    %v91 = vsel %vm89, %v84, 0
    %93 = vmatprep.subr.bf16.mxu0 0
    %94 = vmatpush1.bf16.msra.mxu0 0
    %95 = vmatprep.subr.bf16.mxu0 0
    %96 = vmatpush1.bf16.msra.mxu0 0
    %97 = vmatprep.subr.bf16.mxu0 0
    %98 = vmatpush1.bf16.msra.mxu0 0
    %99 = vmatprep.subr.bf16.mxu0 0
    %100 = vmatpush1.bf16.msra.mxu0 0
    %101 = vmatprep.subr.bf16.mxu0 0
    %102 = vmatpush1.bf16.msra.mxu0 0
    %103 = vmatprep.subr.bf16.mxu0 0
    %104 = vmatpush1.bf16.msra.mxu0 0
    %105 = vmatprep.subr.bf16.mxu0 0
    %106 = vmatpush1.bf16.msra.mxu0 0
    %107 = vmatprep.subr.bf16.mxu0 0
    %108 = vmatpush1.bf16.msra.mxu0 %v91
    %109 = vmatprep.subr.bf16.mxu0 0
    %110 = vmatpush2.bf16.msra.mxu0 0
    %111 = vmatprep.subr.bf16.mxu0 0
    %112 = vmatpush2.bf16.msra.mxu0 0
    %113 = vmatprep.subr.bf16.mxu0 0
    %114 = vmatpush2.bf16.msra.mxu0 0
    %115 = vmatprep.subr.bf16.mxu0 0
    %116 = vmatpush2.bf16.msra.mxu0 0
    %117 = vmatprep.subr.bf16.mxu0 0
    %118 = vmatpush2.bf16.msra.mxu0 0
    %119 = vmatprep.subr.bf16.mxu0 0
    %120 = vmatpush2.bf16.msra.mxu0 0
    %121 = vmatprep.subr.bf16.mxu0 0
    %122 = vmatpush2.bf16.msra.mxu0 0
    %123 = vmatprep.subr.bf16.mxu0 0
    %124 = vmatpush2.bf16.msra.mxu0 0
    %125 = vmatprep.mubr.bf16.mxu0 0
    %126 = vmatmul.mubr.bf16.gmra.mxu0 %v87
    %v127 = vpop.f32.mrf.mxu0
    %v128 = vadd.f32 0.0, %v127
    %v129 = vpop.f32.mrf.mxu0
    %v130 = vpop.f32.mrf.mxu0
    %v131 = vpop.f32.mrf.mxu0
    %132 = vdwg.mxu0
    %v135 = vunpack.c.l.b16 %v74
    %v136 = vunpack.c.l.b16 %v75
    %v137 = vpack.c.b16 %v136, %v135
    %vm139 = vcmask 130048
    %v141 = vsel %vm139, %v73, 0
    %143 = vmatprep.subr.bf16.mxu0 0
    %144 = vmatpush1.bf16.msra.mxu0 0
    %145 = vmatprep.subr.bf16.mxu0 0
    %146 = vmatpush1.bf16.msra.mxu0 0
    %147 = vmatprep.subr.bf16.mxu0 0
    %148 = vmatpush1.bf16.msra.mxu0 0
    %149 = vmatprep.subr.bf16.mxu0 0
    %150 = vmatpush1.bf16.msra.mxu0 0
    %151 = vmatprep.subr.bf16.mxu0 0
    %152 = vmatpush1.bf16.msra.mxu0 0
    %153 = vmatprep.subr.bf16.mxu0 0
    %154 = vmatpush1.bf16.msra.mxu0 0
    %155 = vmatprep.subr.bf16.mxu0 0
    %156 = vmatpush1.bf16.msra.mxu0 0
    %157 = vmatprep.subr.bf16.mxu0 0
    %158 = vmatpush1.bf16.msra.mxu0 %v137
    %159 = vmatprep.subr.bf16.mxu0 0
    %160 = vmatpush2.bf16.msra.mxu0 0
    %161 = vmatprep.subr.bf16.mxu0 0
    %162 = vmatpush2.bf16.msra.mxu0 0
    %163 = vmatprep.subr.bf16.mxu0 0
    %164 = vmatpush2.bf16.msra.mxu0 0
    %165 = vmatprep.subr.bf16.mxu0 0
    %166 = vmatpush2.bf16.msra.mxu0 0
    %167 = vmatprep.subr.bf16.mxu0 0
    %168 = vmatpush2.bf16.msra.mxu0 0
    %169 = vmatprep.subr.bf16.mxu0 0
    %170 = vmatpush2.bf16.msra.mxu0 0
    %171 = vmatprep.subr.bf16.mxu0 0
    %172 = vmatpush2.bf16.msra.mxu0 0
    %173 = vmatprep.subr.bf16.mxu0 0
    %174 = vmatpush2.bf16.msra.mxu0 0
    %175 = vmatprep.mubr.bf16.mxu0 0
    %176 = vmatmul.mubr.bf16.gmra.mxu0 %v141
    %v177 = vpop.f32.mrf.mxu0
    %v178 = vadd.f32 %v128, %v177
    %v179 = vpop.f32.mrf.mxu0
    %v180 = vpop.f32.mrf.mxu0
    %v181 = vpop.f32.mrf.mxu0
    %182 = vdwg.mxu0
    %v183 = vld [vmem:[%s4] sm:$0x1]
    %v185 = vlaneseq
    %v186 = vshrl.u32 %v185, 7
    %v187 = vsub.s32 0, %v186
    %v188 = vrot.slane %v183, %v187
    %v190 = vadd.f32 %v178, %v188
    %v191 = vmax.f32 %v190, 0.0
    %v192 = vpack.c.bf16 %v191, %v191
    %v193 = vld [vmem:[%s5] sm:$0xf]
    %v194 = vld [vmem:[%s5 + $0x4] sm:$0xf]
    %v195 = vld [vmem:[%s5 + $0x8] sm:$0xf]
    %v196 = vld [vmem:[%s5 + $0xc] sm:$0xf]
    %v197 = vld [vmem:[%s5 + $0x10] sm:$0xf]
    %v198 = vld [vmem:[%s5 + $0x14] sm:$0xf]
    %v199 = vld [vmem:[%s5 + $0x18] sm:$0xf]
    %v200 = vld [vmem:[%s5 + $0x1c] sm:$0xf]
    %v201 = vld [vmem:[%s6] sm:$0x1]
    %v203 = vlaneseq
    %v204 = vshrl.u32 %v203, 7
    %v205 = vsub.s32 0, %v204
    %v206 = vrot.slane %v201, %v205
    %v216 = vunpack.c.l.b16 %v193
    %v217 = vunpack.c.l.b16 %v194
    %v218 = vunpack.c.l.b16 %v195
    %v219 = vunpack.c.l.b16 %v196
    %v220 = vunpack.c.l.b16 %v197
    %v221 = vunpack.c.l.b16 %v198
    %v222 = vunpack.c.l.b16 %v199
    %v223 = vunpack.c.l.b16 %v200
    %v224 = vpack.c.b16 %v217, %v216
    %v225 = vpack.c.b16 %v219, %v218
    %v226 = vpack.c.b16 %v221, %v220
    %v227 = vpack.c.b16 %v223, %v222
    %vm232 = vcmask 523264
    %v234 = vsel %vm232, %v192, 0
    %236 = vmatprep.subr.bf16.mxu0 0
    %237 = vmatpush1.bf16.msra.mxu0 0
    %238 = vmatprep.subr.bf16.mxu0 0
    %239 = vmatpush1.bf16.msra.mxu0 0
    %240 = vmatprep.subr.bf16.mxu0 0
    %241 = vmatpush1.bf16.msra.mxu0 0
    %242 = vmatprep.subr.bf16.mxu0 0
    %243 = vmatpush1.bf16.msra.mxu0 0
    %244 = vmatprep.subr.bf16.mxu0 0
    %245 = vmatpush1.bf16.msra.mxu0 %v227
    %246 = vmatprep.subr.bf16.mxu0 0
    %247 = vmatpush1.bf16.msra.mxu0 %v226
    %248 = vmatprep.subr.bf16.mxu0 0
    %249 = vmatpush1.bf16.msra.mxu0 %v225
    %250 = vmatprep.subr.bf16.mxu0 0
    %251 = vmatpush1.bf16.msra.mxu0 %v224
    %252 = vmatprep.subr.bf16.mxu0 0
    %253 = vmatpush2.bf16.msra.mxu0 0
    %254 = vmatprep.subr.bf16.mxu0 0
    %255 = vmatpush2.bf16.msra.mxu0 0
    %256 = vmatprep.subr.bf16.mxu0 0
    %257 = vmatpush2.bf16.msra.mxu0 0
    %258 = vmatprep.subr.bf16.mxu0 0
    %259 = vmatpush2.bf16.msra.mxu0 0
    %260 = vmatprep.subr.bf16.mxu0 0
    %261 = vmatpush2.bf16.msra.mxu0 0
    %262 = vmatprep.subr.bf16.mxu0 0
    %263 = vmatpush2.bf16.msra.mxu0 0
    %264 = vmatprep.subr.bf16.mxu0 0
    %265 = vmatpush2.bf16.msra.mxu0 0
    %266 = vmatprep.subr.bf16.mxu0 0
    %267 = vmatpush2.bf16.msra.mxu0 0
    %268 = vmatprep.mubr.bf16.mxu0 0
    %269 = vmatmul.mubr.bf16.gmra.mxu0 %v234
    %v270 = vpop.f32.mrf.mxu0
    %v271 = vadd.f32 %v206, %v270
    %v272 = vpop.f32.mrf.mxu0
    %v273 = vpop.f32.mrf.mxu0
    %v274 = vpop.f32.mrf.mxu0
    %275 = vdwg.mxu0
    %v276 = vmax.f32 %v271, 0.0
    %v277 = vpack.c.bf16 %v276, %v276
    %v278 = vld [vmem:[%s7] sm:$0xf]
    %v279 = vld [vmem:[%s7 + $0x4] sm:$0xf]
    %v280 = vld [vmem:[%s7 + $0x8] sm:$0xf]
    %v281 = vld [vmem:[%s7 + $0xc] sm:$0xf]
    %v282 = vld [vmem:[%s7 + $0x10] sm:$0xf]
    %v283 = vld [vmem:[%s7 + $0x14] sm:$0xf]
    %v284 = vld [vmem:[%s7 + $0x18] sm:$0xf]
    %v285 = vld [vmem:[%s7 + $0x1c] sm:$0xf]
    %v286 = vld [vmem:[%s8] sm:$0x1]
    %v288 = vlaneseq
    %v289 = vshrl.u32 %v288, 7
    %v290 = vsub.s32 0, %v289
    %v291 = vrot.slane %v286, %v290
    %v301 = vunpack.c.l.b16 %v278
    %v302 = vunpack.c.l.b16 %v279
    %v303 = vunpack.c.l.b16 %v280
    %v304 = vunpack.c.l.b16 %v281
    %v305 = vunpack.c.l.b16 %v282
    %v306 = vunpack.c.l.b16 %v283
    %v307 = vunpack.c.l.b16 %v284
    %v308 = vunpack.c.l.b16 %v285
    %v309 = vpack.c.b16 %v302, %v301
    %v310 = vpack.c.b16 %v304, %v303
    %v311 = vpack.c.b16 %v306, %v305
    %v312 = vpack.c.b16 %v308, %v307
    %v318 = vsel %vm232, %v277, 0
    %320 = vmatprep.subr.bf16.mxu0 0
    %321 = vmatpush1.bf16.msra.mxu0 0
    %322 = vmatprep.subr.bf16.mxu0 0
    %323 = vmatpush1.bf16.msra.mxu0 0
    %324 = vmatprep.subr.bf16.mxu0 0
    %325 = vmatpush1.bf16.msra.mxu0 0
    %326 = vmatprep.subr.bf16.mxu0 0
    %327 = vmatpush1.bf16.msra.mxu0 0
    %328 = vmatprep.subr.bf16.mxu0 0
    %329 = vmatpush1.bf16.msra.mxu0 %v312
    %330 = vmatprep.subr.bf16.mxu0 0
    %331 = vmatpush1.bf16.msra.mxu0 %v311
    %332 = vmatprep.subr.bf16.mxu0 0
    %333 = vmatpush1.bf16.msra.mxu0 %v310
    %334 = vmatprep.subr.bf16.mxu0 0
    %335 = vmatpush1.bf16.msra.mxu0 %v309
    %336 = vmatprep.subr.bf16.mxu0 0
    %337 = vmatpush2.bf16.msra.mxu0 0
    %338 = vmatprep.subr.bf16.mxu0 0
    %339 = vmatpush2.bf16.msra.mxu0 0
    %340 = vmatprep.subr.bf16.mxu0 0
    %341 = vmatpush2.bf16.msra.mxu0 0
    %342 = vmatprep.subr.bf16.mxu0 0
    %343 = vmatpush2.bf16.msra.mxu0 0
    %344 = vmatprep.subr.bf16.mxu0 0
    %345 = vmatpush2.bf16.msra.mxu0 0
    %346 = vmatprep.subr.bf16.mxu0 0
    %347 = vmatpush2.bf16.msra.mxu0 0
    %348 = vmatprep.subr.bf16.mxu0 0
    %349 = vmatpush2.bf16.msra.mxu0 0
    %350 = vmatprep.subr.bf16.mxu0 0
    %351 = vmatpush2.bf16.msra.mxu0 0
    %352 = vmatprep.mubr.bf16.mxu0 0
    %353 = vmatmul.mubr.bf16.gmra.mxu0 %v318
    %v354 = vpop.f32.mrf.mxu0
    %v355 = vadd.f32 %v291, %v354
    %v356 = vpop.f32.mrf.mxu0
    %v357 = vpop.f32.mrf.mxu0
    %v358 = vpop.f32.mrf.mxu0
    %359 = vdwg.mxu0
    %vm360 = vcmask 31744
    %361 = vst.msk [vmem:[%s9] sm:$0xff] %vm360, %v355
    // Predicated region
    $region50: #{tpu_custom_call.1} parent=1 // pred_check
      _
    $region51: #{tpu_custom_call.1} parent=1 // pred_check_branch
      %363 = sbr.rel (0) target = $region53
    $region52: #{tpu_custom_call.1} parent=1 // pred_region
      _
    $region53: #{tpu_custom_call.1} parent=1 // pred_fallthru
      _
    // Predicated region
    $region54: #{tpu_custom_call.1} parent=1 // pred_check
      _
    $region55: #{tpu_custom_call.1} parent=1 // pred_check_branch
      %365 = sbr.rel (0) target = $region57
    $region56: #{tpu_custom_call.1} parent=1 // pred_region
      _
    $region57: #{tpu_custom_call.1} parent=1 // pred_fallthru
      _
    %366 = vsyncpa [#allocation3], 1
    %367 = vsyncpa [#allocation5], 1

// kernel: tpu_custom_call.1
$region0: #{tpu_custom_call.1}
  #allocation0 [shape = 'u32[]', space=smem, size = 0x4, offset = 0x4, fixed_abs, tag = 'smem constant byte address 0x4 - core index']
  #allocation1 [shape = 'u32[144,128]{1,0:T(1,128)}', space=vmem, size = 0x12000, scoped, tag = 'internal scratch']
  %s0 = inlined_call_operand.vmem [shape: f32[8,16], index: 0, kind: input, shape index: {}]
  %s1 = inlined_call_operand.hbm [shape: f32[8,12], index: 1, kind: input, shape index: {}]
  %s2 = inlined_call_operand.hbm [shape: bf16[16,64], index: 2, kind: input, shape index: {}]
  %s3 = inlined_call_operand.hbm [shape: bf16[12,64], index: 3, kind: input, shape index: {}]
  %s4 = inlined_call_operand.vmem [shape: f32[1,64], index: 4, kind: input, shape index: {}]
  %s5 = inlined_call_operand.vmem [shape: bf16[64,64], index: 5, kind: input, shape index: {}]
  %s6 = inlined_call_operand.vmem [shape: f32[1,64], index: 6, kind: input, shape index: {}]
  %s7 = inlined_call_operand.vmem [shape: bf16[64,4], index: 7, kind: input, shape index: {}]
  %s8 = inlined_call_operand.vmem [shape: f32[1,4], index: 8, kind: input, shape index: {}]
  %s9 = inlined_call_operand.vmem [shape: f32[8,4], index: 9, kind: output, shape index: {}]
  %s10 = sld [smem:[#allocation0]]
  $region58: #{tpu_custom_call.1} parent=0
    _
  %s12 = ssub.s32 1, %s10
  %s13 = scalar_select 0, %s12, %s10
  $region1: #{tpu_custom_call.1} parent=0
    #allocation2 [shape = 'u8[4096]{0}', space=vmem, size = 0x1000, scoped, tag = 'input window, operand 1, single buffered']
    #allocation3 [shape = 's32[1]{0}', space=sflag, size = 0x4, scoped, tag = 'scoped memory for tpu_custom_call.1']
    #allocation4 [shape = 'u8[4096]{0}', space=vmem, size = 0x1000, scoped, tag = 'input window, operand 2, single buffered']
    #allocation5 [shape = 's32[1]{0}', space=sflag, size = 0x4, scoped, tag = 'scoped memory for tpu_custom_call.1']
    #allocation6 [shape = 'u8[4096]{0}', space=vmem, size = 0x1000, scoped, tag = 'input window, operand 3, single buffered']
    %14 = vsyncpa [#allocation3], 0
    %15 = vsyncpa [#allocation5], 0
    // Predicated region
    $region2: #{tpu_custom_call.1} parent=1 // pred_check
      _
    $region3: #{tpu_custom_call.1} parent=1 // pred_check_branch
      %17 = sbr.rel (0) target = $region5
    $region4: #{tpu_custom_call.1} parent=1 // pred_region
      _
    $region5: #{tpu_custom_call.1} parent=1 // pred_fallthru
      _
    // Predicated region
    $region6: #{tpu_custom_call.1} parent=1 // pred_check
      _
    $region7: #{tpu_custom_call.1} parent=1 // pred_check_branch
      %19 = sbr.rel (0) target = $region9
    $region8: #{tpu_custom_call.1} parent=1 // pred_region
      %s21 = ssub.s32 128, 128
      %22 = vsyncadd [#allocation3], %s21
      %s24 = sshll.u32 [#allocation2], 4
      %s25 = int_to_ptr.vmem [resolvable:$true] %s24
      %27 = dma.hbm_to_vmem [thread:$0]  %s1, 128, %s25, [#allocation3]
    $region9: #{tpu_custom_call.1} parent=1 // pred_fallthru
      _
    // Predicated region
    $region10: #{tpu_custom_call.1} parent=1 // pred_check
      _
    $region11: #{tpu_custom_call.1} parent=1 // pred_check_branch
      %29 = sbr.rel (0) target = $region13
    $region12: #{tpu_custom_call.1} parent=1 // pred_region
      %s31 = ssub.s32 128, 128
      %32 = vsyncadd [#allocation5], %s31
      %s33 = sshll.u32 [#allocation4], 4
      %s34 = int_to_ptr.vmem [resolvable:$true] %s33
      %39 = dma.hbm_to_vmem [thread:$0]  %s2, 128, %s34, [#allocation5], 64, 64, 4
    $region13: #{tpu_custom_call.1} parent=1 // pred_fallthru
      _
    // Predicated region
    $region14: #{tpu_custom_call.1} parent=1 // pred_check
      _
    $region15: #{tpu_custom_call.1} parent=1 // pred_check_branch
      %41 = sbr.rel (0) target = $region17
    $region16: #{tpu_custom_call.1} parent=1 // pred_region
      %s43 = ssub.s32 128, 128
      %44 = vsyncadd [#allocation5], %s43
      %s45 = sshll.u32 [#allocation6], 4
      %s46 = int_to_ptr.vmem [resolvable:$true] %s45
      %51 = dma.hbm_to_vmem [thread:$0]  %s3, 128, %s46, [#allocation5], 64, 64, 4
    $region17: #{tpu_custom_call.1} parent=1 // pred_fallthru
      _
    // Predicated region
    $region18: #{tpu_custom_call.1} parent=1 // pred_check
      _
    $region19: #{tpu_custom_call.1} parent=1 // pred_check_branch
      %53 = sbr.rel (0) target = $region21
    $region20: #{tpu_custom_call.1} parent=1 // pred_region
      _
    $region21: #{tpu_custom_call.1} parent=1 // pred_fallthru
      _
    // Predicated region
    $region22: #{tpu_custom_call.1} parent=1 // pred_check
      _
    $region23: #{tpu_custom_call.1} parent=1 // pred_check_branch
      %55 = sbr.rel (0) target = $region25
    $region24: #{tpu_custom_call.1} parent=1 // pred_region
      _
    $region25: #{tpu_custom_call.1} parent=1 // pred_fallthru
      _
    // Predicated region
    $region26: #{tpu_custom_call.1} parent=1 // pred_check
      _
    $region27: #{tpu_custom_call.1} parent=1 // pred_check_branch
      %57 = sbr.rel (0) target = $region29
    $region28: #{tpu_custom_call.1} parent=1 // pred_region
      _
    $region29: #{tpu_custom_call.1} parent=1 // pred_fallthru
      _
    // Predicated region
    $region30: #{tpu_custom_call.1} parent=1 // pred_check
      _
    $region31: #{tpu_custom_call.1} parent=1 // pred_check_branch
      %59 = sbr.rel (0) target = $region33
    $region32: #{tpu_custom_call.1} parent=1 // pred_region
      _
    $region33: #{tpu_custom_call.1} parent=1 // pred_fallthru
      _
    // Predicated region
    $region34: #{tpu_custom_call.1} parent=1 // pred_check
      _
    $region35: #{tpu_custom_call.1} parent=1 // pred_check_branch
      %61 = sbr.rel (0) target = $region37
    $region36: #{tpu_custom_call.1} parent=1 // pred_region
      _
    $region37: #{tpu_custom_call.1} parent=1 // pred_fallthru
      _
    // Predicated region
    $region38: #{tpu_custom_call.1} parent=1 // pred_check
      _
    $region39: #{tpu_custom_call.1} parent=1 // pred_check_branch
      %63 = sbr.rel (0) target = $region41
    $region40: #{tpu_custom_call.1} parent=1 // pred_region
      %64 = dma.done [#allocation3], 128
    $region41: #{tpu_custom_call.1} parent=1 // pred_fallthru
      _
    // Predicated region
    $region42: #{tpu_custom_call.1} parent=1 // pred_check
      _
    $region43: #{tpu_custom_call.1} parent=1 // pred_check_branch
      %66 = sbr.rel (0) target = $region45
    $region44: #{tpu_custom_call.1} parent=1 // pred_region
      %67 = dma.done [#allocation5], 128
    $region45: #{tpu_custom_call.1} parent=1 // pred_fallthru
      _
    // Predicated region
    $region46: #{tpu_custom_call.1} parent=1 // pred_check
      _
    $region47: #{tpu_custom_call.1} parent=1 // pred_check_branch
      %69 = sbr.rel (0) target = $region49
    $region48: #{tpu_custom_call.1} parent=1 // pred_region
      %70 = dma.done [#allocation5], 128
    $region49: #{tpu_custom_call.1} parent=1 // pred_fallthru
      _
    %v72 = vld [vmem:[%s0] sm:$0xff]
    %v73 = vpack.c.bf16 %v72, %v72
    %v74 = vld [vmem:[#allocation4] sm:$0xf]
    %v75 = vld [vmem:[#allocation4 + $0x4] sm:$0xf]
    %v76 = vld [vmem:[#allocation2] sm:$0xff]
    %v77 = vpack.c.bf16 %v76, %v76
    %v78 = vld [vmem:[#allocation6] sm:$0xf]
    %v79 = vld [vmem:[#allocation6 + $0x4] sm:$0x3]
    %v82 = vunpack.c.l.b16 %v78
    %v83 = vunpack.c.l.b16 %v79
    %v84 = vpack.c.b16 %v83, %v82
    %vm85 = vcmask 97280
    %v87 = vsel %vm85, %v77, 0
    %vm89 = vcmask 1045504
    %v91 = vsel %vm89, %v84, 0
    %93 = vmatprep.subr.bf16.mxu0 0
    %94 = vmatpush1.bf16.msra.mxu0 0
    %95 = vmatprep.subr.bf16.mxu0 0
    %96 = vmatpush1.bf16.msra.mxu0 0
    %97 = vmatprep.subr.bf16.mxu0 0
    %98 = vmatpush1.bf16.msra.mxu0 0
    %99 = vmatprep.subr.bf16.mxu0 0
    %100 = vmatpush1.bf16.msra.mxu0 0
    %101 = vmatprep.subr.bf16.mxu0 0
    %102 = vmatpush1.bf16.msra.mxu0 0
    %103 = vmatprep.subr.bf16.mxu0 0
    %104 = vmatpush1.bf16.msra.mxu0 0
    %105 = vmatprep.subr.bf16.mxu0 0
    %106 = vmatpush1.bf16.msra.mxu0 0
    %107 = vmatprep.subr.bf16.mxu0 0
    %108 = vmatpush1.bf16.msra.mxu0 %v91
    %109 = vmatprep.subr.bf16.mxu0 0
    %110 = vmatpush2.bf16.msra.mxu0 0
    %111 = vmatprep.subr.bf16.mxu0 0
    %112 = vmatpush2.bf16.msra.mxu0 0
    %113 = vmatprep.subr.bf16.mxu0 0
    %114 = vmatpush2.bf16.msra.mxu0 0
    %115 = vmatprep.subr.bf16.mxu0 0
    %116 = vmatpush2.bf16.msra.mxu0 0
    %117 = vmatprep.subr.bf16.mxu0 0
    %118 = vmatpush2.bf16.msra.mxu0 0
    %119 = vmatprep.subr.bf16.mxu0 0
    %120 = vmatpush2.bf16.msra.mxu0 0
    %121 = vmatprep.subr.bf16.mxu0 0
    %122 = vmatpush2.bf16.msra.mxu0 0
    %123 = vmatprep.subr.bf16.mxu0 0
    %124 = vmatpush2.bf16.msra.mxu0 0
    %125 = vmatprep.mubr.bf16.mxu0 0
    %126 = vmatmul.mubr.bf16.gmra.mxu0 %v87
    %v127 = vpop.f32.mrf.mxu0
    %v128 = vadd.f32 0.0, %v127
    %v129 = vpop.f32.mrf.mxu0
    %v130 = vpop.f32.mrf.mxu0
    %v131 = vpop.f32.mrf.mxu0
    %132 = vdwg.mxu0
    %v135 = vunpack.c.l.b16 %v74
    %v136 = vunpack.c.l.b16 %v75
    %v137 = vpack.c.b16 %v136, %v135
    %vm139 = vcmask 130048
    %v141 = vsel %vm139, %v73, 0
    %143 = vmatprep.subr.bf16.mxu0 0
    %144 = vmatpush1.bf16.msra.mxu0 0
    %145 = vmatprep.subr.bf16.mxu0 0
    %146 = vmatpush1.bf16.msra.mxu0 0
    %147 = vmatprep.subr.bf16.mxu0 0
    %148 = vmatpush1.bf16.msra.mxu0 0
    %149 = vmatprep.subr.bf16.mxu0 0
    %150 = vmatpush1.bf16.msra.mxu0 0
    %151 = vmatprep.subr.bf16.mxu0 0
    %152 = vmatpush1.bf16.msra.mxu0 0
    %153 = vmatprep.subr.bf16.mxu0 0
    %154 = vmatpush1.bf16.msra.mxu0 0
    %155 = vmatprep.subr.bf16.mxu0 0
    %156 = vmatpush1.bf16.msra.mxu0 0
    %157 = vmatprep.subr.bf16.mxu0 0
    %158 = vmatpush1.bf16.msra.mxu0 %v137
    %159 = vmatprep.subr.bf16.mxu0 0
    %160 = vmatpush2.bf16.msra.mxu0 0
    %161 = vmatprep.subr.bf16.mxu0 0
    %162 = vmatpush2.bf16.msra.mxu0 0
    %163 = vmatprep.subr.bf16.mxu0 0
    %164 = vmatpush2.bf16.msra.mxu0 0
    %165 = vmatprep.subr.bf16.mxu0 0
    %166 = vmatpush2.bf16.msra.mxu0 0
    %167 = vmatprep.subr.bf16.mxu0 0
    %168 = vmatpush2.bf16.msra.mxu0 0
    %169 = vmatprep.subr.bf16.mxu0 0
    %170 = vmatpush2.bf16.msra.mxu0 0
    %171 = vmatprep.subr.bf16.mxu0 0
    %172 = vmatpush2.bf16.msra.mxu0 0
    %173 = vmatprep.subr.bf16.mxu0 0
    %174 = vmatpush2.bf16.msra.mxu0 0
    %175 = vmatprep.mubr.bf16.mxu0 0
    %176 = vmatmul.mubr.bf16.gmra.mxu0 %v141
    %v177 = vpop.f32.mrf.mxu0
    %v178 = vadd.f32 %v128, %v177
    %v179 = vpop.f32.mrf.mxu0
    %v180 = vpop.f32.mrf.mxu0
    %v181 = vpop.f32.mrf.mxu0
    %182 = vdwg.mxu0
    %v183 = vld [vmem:[%s4] sm:$0x1]
    %v185 = vlaneseq
    %v186 = vshrl.u32 %v185, 7
    %v187 = vsub.s32 0, %v186
    %v188 = vrot.slane %v183, %v187
    %v190 = vadd.f32 %v178, %v188
    %v191 = vmax.f32 %v190, 0.0
    %v192 = vpack.c.bf16 %v191, %v191
    %v193 = vld [vmem:[%s5] sm:$0xf]
    %v194 = vld [vmem:[%s5 + $0x4] sm:$0xf]
    %v195 = vld [vmem:[%s5 + $0x8] sm:$0xf]
    %v196 = vld [vmem:[%s5 + $0xc] sm:$0xf]
    %v197 = vld [vmem:[%s5 + $0x10] sm:$0xf]
    %v198 = vld [vmem:[%s5 + $0x14] sm:$0xf]
    %v199 = vld [vmem:[%s5 + $0x18] sm:$0xf]
    %v200 = vld [vmem:[%s5 + $0x1c] sm:$0xf]
    %v201 = vld [vmem:[%s6] sm:$0x1]
    %v203 = vlaneseq
    %v204 = vshrl.u32 %v203, 7
    %v205 = vsub.s32 0, %v204
    %v206 = vrot.slane %v201, %v205
    %v216 = vunpack.c.l.b16 %v193
    %v217 = vunpack.c.l.b16 %v194
    %v218 = vunpack.c.l.b16 %v195
    %v219 = vunpack.c.l.b16 %v196
    %v220 = vunpack.c.l.b16 %v197
    %v221 = vunpack.c.l.b16 %v198
    %v222 = vunpack.c.l.b16 %v199
    %v223 = vunpack.c.l.b16 %v200
    %v224 = vpack.c.b16 %v217, %v216
    %v225 = vpack.c.b16 %v219, %v218
    %v226 = vpack.c.b16 %v221, %v220
    %v227 = vpack.c.b16 %v223, %v222
    %vm232 = vcmask 523264
    %v234 = vsel %vm232, %v192, 0
    %236 = vmatprep.subr.bf16.mxu0 0
    %237 = vmatpush1.bf16.msra.mxu0 0
    %238 = vmatprep.subr.bf16.mxu0 0
    %239 = vmatpush1.bf16.msra.mxu0 0
    %240 = vmatprep.subr.bf16.mxu0 0
    %241 = vmatpush1.bf16.msra.mxu0 0
    %242 = vmatprep.subr.bf16.mxu0 0
    %243 = vmatpush1.bf16.msra.mxu0 0
    %244 = vmatprep.subr.bf16.mxu0 0
    %245 = vmatpush1.bf16.msra.mxu0 %v227
    %246 = vmatprep.subr.bf16.mxu0 0
    %247 = vmatpush1.bf16.msra.mxu0 %v226
    %248 = vmatprep.subr.bf16.mxu0 0
    %249 = vmatpush1.bf16.msra.mxu0 %v225
    %250 = vmatprep.subr.bf16.mxu0 0
    %251 = vmatpush1.bf16.msra.mxu0 %v224
    %252 = vmatprep.subr.bf16.mxu0 0
    %253 = vmatpush2.bf16.msra.mxu0 0
    %254 = vmatprep.subr.bf16.mxu0 0
    %255 = vmatpush2.bf16.msra.mxu0 0
    %256 = vmatprep.subr.bf16.mxu0 0
    %257 = vmatpush2.bf16.msra.mxu0 0
    %258 = vmatprep.subr.bf16.mxu0 0
    %259 = vmatpush2.bf16.msra.mxu0 0
    %260 = vmatprep.subr.bf16.mxu0 0
    %261 = vmatpush2.bf16.msra.mxu0 0
    %262 = vmatprep.subr.bf16.mxu0 0
    %263 = vmatpush2.bf16.msra.mxu0 0
    %264 = vmatprep.subr.bf16.mxu0 0
    %265 = vmatpush2.bf16.msra.mxu0 0
    %266 = vmatprep.subr.bf16.mxu0 0
    %267 = vmatpush2.bf16.msra.mxu0 0
    %268 = vmatprep.mubr.bf16.mxu0 0
    %269 = vmatmul.mubr.bf16.gmra.mxu0 %v234
    %v270 = vpop.f32.mrf.mxu0
    %v271 = vadd.f32 %v206, %v270
    %v272 = vpop.f32.mrf.mxu0
    %v273 = vpop.f32.mrf.mxu0
    %v274 = vpop.f32.mrf.mxu0
    %275 = vdwg.mxu0
    %v276 = vmax.f32 %v271, 0.0
    %v277 = vpack.c.bf16 %v276, %v276
    %v278 = vld [vmem:[%s7] sm:$0xf]
    %v279 = vld [vmem:[%s7 + $0x4] sm:$0xf]
    %v280 = vld [vmem:[%s7 + $0x8] sm:$0xf]
    %v281 = vld [vmem:[%s7 + $0xc] sm:$0xf]
    %v282 = vld [vmem:[%s7 + $0x10] sm:$0xf]
    %v283 = vld [vmem:[%s7 + $0x14] sm:$0xf]
    %v284 = vld [vmem:[%s7 + $0x18] sm:$0xf]
    %v285 = vld [vmem:[%s7 + $0x1c] sm:$0xf]
    %v286 = vld [vmem:[%s8] sm:$0x1]
    %v288 = vlaneseq
    %v289 = vshrl.u32 %v288, 7
    %v290 = vsub.s32 0, %v289
    %v291 = vrot.slane %v286, %v290
    %v301 = vunpack.c.l.b16 %v278
    %v302 = vunpack.c.l.b16 %v279
    %v303 = vunpack.c.l.b16 %v280
    %v304 = vunpack.c.l.b16 %v281
    %v305 = vunpack.c.l.b16 %v282
    %v306 = vunpack.c.l.b16 %v283
    %v307 = vunpack.c.l.b16 %v284
    %v308 = vunpack.c.l.b16 %v285
    %v309 = vpack.c.b16 %v302, %v301
    %v310 = vpack.c.b16 %v304, %v303
    %v311 = vpack.c.b16 %v306, %v305
    %v312 = vpack.c.b16 %v308, %v307
    %v318 = vsel %vm232, %v277, 0
    %320 = vmatprep.subr.bf16.mxu0 0
    %321 = vmatpush1.bf16.msra.mxu0 0
    %322 = vmatprep.subr.bf16.mxu0 0
    %323 = vmatpush1.bf16.msra.mxu0 0
    %324 = vmatprep.subr.bf16.mxu0 0
    %325 = vmatpush1.bf16.msra.mxu0 0
    %326 = vmatprep.subr.bf16.mxu0 0
    %327 = vmatpush1.bf16.msra.mxu0 0
    %328 = vmatprep.subr.bf16.mxu0 0
    %329 = vmatpush1.bf16.msra.mxu0 %v312
    %330 = vmatprep.subr.bf16.mxu0 0
    %331 = vmatpush1.bf16.msra.mxu0 %v311
    %332 = vmatprep.subr.bf16.mxu0 0
    %333 = vmatpush1.bf16.msra.mxu0 %v310
    %334 = vmatprep.subr.bf16.mxu0 0
    %335 = vmatpush1.bf16.msra.mxu0 %v309
    %336 = vmatprep.subr.bf16.mxu0 0
    %337 = vmatpush2.bf16.msra.mxu0 0
    %338 = vmatprep.subr.bf16.mxu0 0
    %339 = vmatpush2.bf16.msra.mxu0 0
    %340 = vmatprep.subr.bf16.mxu0 0
    %341 = vmatpush2.bf16.msra.mxu0 0
    %342 = vmatprep.subr.bf16.mxu0 0
    %343 = vmatpush2.bf16.msra.mxu0 0
    %344 = vmatprep.subr.bf16.mxu0 0
    %345 = vmatpush2.bf16.msra.mxu0 0
    %346 = vmatprep.subr.bf16.mxu0 0
    %347 = vmatpush2.bf16.msra.mxu0 0
    %348 = vmatprep.subr.bf16.mxu0 0
    %349 = vmatpush2.bf16.msra.mxu0 0
    %350 = vmatprep.subr.bf16.mxu0 0
    %351 = vmatpush2.bf16.msra.mxu0 0
    %352 = vmatprep.mubr.bf16.mxu0 0
    %353 = vmatmul.mubr.bf16.gmra.mxu0 %v318
    %v354 = vpop.f32.mrf.mxu0
    %v355 = vadd.f32 %v291, %v354
    %v356 = vpop.f32.mrf.mxu0
    %v357 = vpop.f32.mrf.mxu0
    %v358 = vpop.f32.mrf.mxu0
    %359 = vdwg.mxu0
    %vm360 = vcmask 31744
    %361 = vst.msk [vmem:[%s9] sm:$0xff] %vm360, %v355
    // Predicated region
    $region50: #{tpu_custom_call.1} parent=1 // pred_check
      _
    $region51: #{tpu_custom_call.1} parent=1 // pred_check_branch
      %363 = sbr.rel (0) target = $region53
    $region52: #{tpu_custom_call.1} parent=1 // pred_region
      _
    $region53: #{tpu_custom_call.1} parent=1 // pred_fallthru
      _
    // Predicated region
    $region54: #{tpu_custom_call.1} parent=1 // pred_check
      _
    $region55: #{tpu_custom_call.1} parent=1 // pred_check_branch
      %365 = sbr.rel (0) target = $region57
    $region56: #{tpu_custom_call.1} parent=1 // pred_region
      _
    $region57: #{tpu_custom_call.1} parent=1 // pred_fallthru
      _
    %366 = vsyncpa [#allocation3], 1
    %367 = vsyncpa [#allocation5], 1

</llo_original>
